<compile_context>
chip_gen: v6e
topology: v6e:2x2x1
jax: 0.10.0
libtpu: 0.0.40
codegen_flags: <defaults>
</compile_context>

<pallas_src>
import functools
from typing import NamedTuple, Optional

import jax
import jax.numpy as jnp
from jax.experimental import pallas as pl
from jax.experimental.pallas import tpu as pltpu


def _round_up(x: int, m: int) -> int:
    return ((x + m - 1) // m) * m


def _vmem_capacity_bytes() -> int:
    try:
        return int(pltpu.get_tpu_info().vmem_capacity_bytes)
    except Exception:
        return 64 * 1024 * 1024  # conservative: v7x per-TC physical VMEM


def _default_tiles():
    """Per-generation (tm, tn, tk) so tm*tn/(tm+tn) flops/byte clears the HBM roofline."""
    try:
        kind = jax.devices()[0].device_kind.lower()
    except Exception:
        kind = ""
    if "v6" in kind:
        return 1536, 1536, 1024   # ~768 flops/B > ~714 threshold (918 TF/s / ~1.3 TB/s)
    if "v7" in kind:
        return 1024, 1024, 512    # ~512 flops/B > ~311 per-TC threshold, fits 64 MiB VMEM
    return 512, 1024, 512         # v5e & fallback: ~341 flops/B > ~240 threshold


def _linear_kernel(x_ref, w_ref, b_ref, o_ref, acc_ref, *, tk, tn, x_resident):
    """One (tm, tk) x (tk, tn) partial product, accumulated over the K grid axis."""
    j = pl.program_id(1)
    k = pl.program_id(2)

    @pl.when(k == 0)
    def _():
        acc_ref[...] = jnp.zeros_like(acc_ref)

    if x_resident:
        # Full K strip of x is VMEM-resident; slice the (tm, tk) panel for this K step.
        x_blk = x_ref[:, pl.ds(pl.multiple_of(k * tk, 128), tk)]
    else:
        x_blk = x_ref[...]

    acc_ref[...] += jnp.dot(x_blk, w_ref[...], preferred_element_type=jnp.float32)

    @pl.when(k == pl.num_programs(2) - 1)
    def _():
        # Bias add + downcast once per (i, j) output tile (epilogue).
        b = b_ref[:, pl.ds(pl.multiple_of(j * tn, 128), tn)]
        o_ref[...] = (acc_ref[...] + b).astype(o_ref.dtype)


class ProjectionParams(NamedTuple):
    w2d: jax.Array      # (Kp, Vp), compute dtype (bf16), pre-transposed + pre-padded
    b2d: jax.Array      # (1, Vp), float32, pre-padded
    d_model: int
    vocab: int
    tn: int
    tk: int


def prepare_projection_params(weight, bias, *, tn: Optional[int] = None,
                              tk: Optional[int] = None,
                              compute_dtype=jnp.bfloat16) -> ProjectionParams:
    """One-time param prep (transpose, bf16 cast, pad) -- keep out of the hot path.

    weight: (vocab, d_model) torch nn.Linear layout; bias: (vocab,).
    """
    V, K = weight.shape
    _, tn_d, tk_d = _default_tiles()
    tn = min(_round_up(tn or tn_d, 128), _round_up(V, 128))
    tk = min(_round_up(tk or tk_d, 128), _round_up(K, 128))
    Kp, Vp = _round_up(K, tk), _round_up(V, tn)

    w2d = jnp.zeros((Kp, Vp), compute_dtype).at[:K, :V].set(
        weight.T.astype(compute_dtype))
    b2d = jnp.zeros((1, Vp), jnp.float32).at[:, :V].set(
        bias.reshape(1, V).astype(jnp.float32))
    return ProjectionParams(w2d, b2d, K, V, tn, tk)


def projection_layer(x, params: ProjectionParams, *, tm: Optional[int] = None,
                     out_dtype=None):
    """nn.Linear(d_model, vocab) forward: (B, S, d_model) -> (B, S, vocab)."""
    B, S, K = x.shape
    assert K == params.d_model, "x last dim must equal d_model"
    V = params.vocab
    tn, tk = params.tn, params.tk
    Kp, Vp = params.w2d.shape
    compute_dtype = params.w2d.dtype
    out_dtype = out_dtype or x.dtype   # pass jnp.bfloat16 to halve logit writeback
    M = B * S

    tm_default, _, _ = _default_tiles()
    # Small-M / decode path: cover M in one tile so the weight is swept exactly once.
    tm = min(_round_up(tm or tm_default, 8), _round_up(M, 8))
    Mp = _round_up(M, tm)

    in_sz = jnp.dtype(compute_dtype).itemsize
    out_sz = jnp.dtype(out_dtype).itemsize

    vmem_budget = int(_vmem_capacity_bytes() * 0.75)   # never exceeds physical VMEM (v7x 64 MiB)

    def _vmem_needed(resident: bool) -> int:
        x_bytes = 2 * tm * (Kp if resident else tk) * in_sz   # double-buffered
        return (x_bytes
                + 2 * tk * tn * in_sz          # weight tile x2 buffers
                + 2 * 8 * Vp * 4               # bias row (sublane-padded) x2 buffers
                + 2 * tm * tn * out_sz         # output tile x2 buffers
                + tm * tn * 4)                 # f32 accumulator scratch

    x_resident = _vmem_needed(True) <= vmem_budget
    vmem_needed = _vmem_needed(x_resident)
    vmem_limit = min(vmem_budget, max(int(vmem_needed * 1.3), 32 * 1024 * 1024))

    # Only the activations are touched per call; weights/bias are pre-prepared.
    x2d = x.reshape(M, K).astype(compute_dtype)
    if (Mp, Kp) != (M, K):
        x2d = jnp.zeros((Mp, Kp), compute_dtype).at[:M, :K].set(x2d)

    grid = (Mp // tm, Vp // tn, Kp // tk)

    if x_resident:
        x_spec = pl.BlockSpec((tm, Kp), lambda i, j, k: (i, 0))   # resident K strip
    else:
        x_spec = pl.BlockSpec((tm, tk), lambda i, j, k: (i, k))   # streamed fallback

    cost = pl.CostEstimate(
        flops=2 * Mp * Kp * Vp,
        transcendentals=0,
        bytes_accessed=(
            (1 if x_resident else (Vp // tn)) * Mp * Kp * in_sz   # activation reads
            + (Mp // tm) * Kp * Vp * in_sz                        # weight sweeps
            + Vp * 4                                              # bias (once)
            + Mp * Vp * out_sz                                    # logits written
        ),
    )

    kernel = functools.partial(_linear_kernel, tk=tk, tn=tn, x_resident=x_resident)

    out2d = pl.pallas_call(
        kernel,
        out_shape=jax.ShapeDtypeStruct((Mp, Vp), out_dtype),
        grid_spec=pltpu.PrefetchScalarGridSpec(
            num_scalar_prefetch=0,
            grid=grid,
            in_specs=[
                x_spec,
                pl.BlockSpec((tk, tn), lambda i, j, k: (k, j)),   # W^T tile (streamed)
                pl.BlockSpec((1, Vp), lambda i, j, k: (0, 0)),    # whole bias row, DMA'd once
            ],
            out_specs=pl.BlockSpec((tm, tn), lambda i, j, k: (i, j)),
            scratch_shapes=[pltpu.VMEM((tm, tn), jnp.float32)],
        ),
        compiler_params=pltpu.CompilerParams(
            # v7x megacore shards the parallel i/j axes; for tiny problems the
            # grid degenerates to 1x1 and one TC idles (unavoidable here).
            dimension_semantics=("parallel", "parallel", "arbitrary"),
            vmem_limit_bytes=vmem_limit,
        ),
        cost_estimate=cost,
    )(x2d, params.w2d, params.b2d)

    return out2d[:M, :V].reshape(B, S, V)


if __name__ == "__main__":
    # Small shapes consistent with the module: (batch, seq, d_model) -> (batch, seq, vocab)
    batch, seq, d_model, vocab = 2, 8, 32, 128

    key = jax.random.PRNGKey(0)
    kx, kw, kb = jax.random.split(key, 3)

    # Deterministic init mimicking nn.Linear default (uniform +/- 1/sqrt(d_model)).
    bound = 1.0 / jnp.sqrt(jnp.float32(d_model))
    weight = jax.random.uniform(kw, (vocab, d_model), jnp.float32, -bound, bound)
    bias = jax.random.uniform(kb, (vocab,), jnp.float32, -bound, bound)
    x = jax.random.normal(kx, (batch, seq, d_model), jnp.float32)

    # One-time parameter prep (transpose + bf16 cast + pad) -- outside the hot path.
    params = prepare_projection_params(weight, bias)

    out = projection_layer(x, params)
    jax.block_until_ready(out)

    assert out.shape == (batch, seq, vocab)

    # Tight check against a reference built from the same bf16-rounded operands
    # (isolates kernel correctness from the intentional bf16 compute cast).
    xb = x.astype(jnp.bfloat16).astype(jnp.float32)
    wb = weight.astype(jnp.bfloat16).astype(jnp.float32)
    ref_bf16 = xb @ wb.T + bias
    assert jnp.allclose(out, ref_bf16, atol=1e-3, rtol=1e-3)

    # Loose check against the exact f32 nn.Linear reference (bf16 rounding only).
    ref_f32 = x @ weight.T + bias
    assert jnp.allclose(out, ref_f32, atol=1e-1, rtol=1e-1)

    print("KERNEL_OK")
</pallas_src>

<mosaic_0001>
module attributes {stable_mosaic.version = 11 : i64} {
  func.func @_linear_kernel(%arg0: i32, %arg1: i32, %arg2: i32, %arg3: memref<16x128xbf16, #tpu.memory_space<vmem>>, %arg4: memref<128x128xbf16, #tpu.memory_space<vmem>>, %arg5: memref<1x128xf32, #tpu.memory_space<vmem>>, %arg6: memref<16x128xf32, #tpu.memory_space<vmem>>, %arg7: memref<16x128xf32, #tpu.memory_space<vmem>>) attributes {dimension_semantics = [#tpu.dimension_semantics<parallel>, #tpu.dimension_semantics<parallel>, #tpu.dimension_semantics<arbitrary>], iteration_bounds = array<i64: 1, 1, 1>, scalar_prefetch = 0 : i64, scratch_operands = 1 : i64, tpu.core_type = #tpu.core_type<tc>, window_params = [{transform_indices = @transform_0, window_bounds = array<i64: 16, 128>}, {transform_indices = @transform_1, window_bounds = array<i64: 128, 128>}, {pipeline_mode = #tpu.pipeline_mode<synchronous>, transform_indices = @transform_2, window_bounds = array<i64: 1, 128>}, {transform_indices = @transform_3, window_bounds = array<i64: 16, 128>}]} {
    %c0_i32 = arith.constant 0 : i32
    %0 = arith.cmpi eq, %arg2, %c0_i32 : i32
    %1 = arith.extui %0 : i1 to i32
    %c0_i32_0 = arith.constant 0 : i32
    %2 = arith.cmpi ne, %1, %c0_i32_0 : i32
    scf.if %2 {
      %cst_9 = arith.constant 0.000000e+00 : f32
      %15 = vector.broadcast %cst_9 : f32 to vector<16x128xf32>
      %c0_10 = arith.constant 0 : index
      %c0_11 = arith.constant 0 : index
      %16 = vector.load %arg7[%c0_10, %c0_11] : memref<16x128xf32, #tpu.memory_space<vmem>>, vector<16x128xf32>
      tpu.vector_store %arg7[%c0_10, %c0_11], %15 {strides = array<i32>} : memref<16x128xf32, #tpu.memory_space<vmem>>, vector<16x128xf32>,
    } else {
    }
    %c128_i32 = arith.constant 128 : i32
    %3 = arith.muli %arg2, %c128_i32 : i32
    %4 = tpu.assume_multiple %3, 128 : i32
    %c0 = arith.constant 0 : index
    %5 = arith.index_cast %4 : i32 to index
    %6 = vector.load %arg3[%c0, %5] : memref<16x128xbf16, #tpu.memory_space<vmem>>, vector<16x128xbf16>
    %c0_1 = arith.constant 0 : index
    %c0_2 = arith.constant 0 : index
    %7 = vector.load %arg7[%c0_1, %c0_2] : memref<16x128xf32, #tpu.memory_space<vmem>>, vector<16x128xf32>
    %c0_3 = arith.constant 0 : index
    %c0_4 = arith.constant 0 : index
    %8 = vector.load %arg4[%c0_3, %c0_4] : memref<128x128xbf16, #tpu.memory_space<vmem>>, vector<128x128xbf16>
    %cst = arith.constant dense<0.000000e+00> : vector<16x128xf32>
    %9 = tpu.matmul %6, %8, %cst {dimension_numbers = #tpu.dot_dimension_numbers<[1], [0], [0], [1], [0, 0, 1, 1], [], []>} : vector<16x128xbf16>, vector<128x128xbf16>, vector<16x128xf32> -> vector<16x128xf32>
    %10 = arith.addf %7, %9 : vector<16x128xf32>
    %c0_5 = arith.constant 0 : index
    %c0_6 = arith.constant 0 : index
    %11 = vector.load %arg7[%c0_5, %c0_6] : memref<16x128xf32, #tpu.memory_space<vmem>>, vector<16x128xf32>
    tpu.vector_store %arg7[%c0_5, %c0_6], %10 {strides = array<i32>} : memref<16x128xf32, #tpu.memory_space<vmem>>, vector<16x128xf32>,
    %c0_i32_7 = arith.constant 0 : i32
    %12 = arith.cmpi eq, %arg2, %c0_i32_7 : i32
    %13 = arith.extui %12 : i1 to i32
    %c0_i32_8 = arith.constant 0 : i32
    %14 = arith.cmpi ne, %13, %c0_i32_8 : i32
    scf.if %14 {
      %c128_i32_9 = arith.constant 128 : i32
      %15 = arith.muli %arg1, %c128_i32_9 : i32
      %16 = tpu.assume_multiple %15, 128 : i32
      %c0_10 = arith.constant 0 : index
      %17 = arith.index_cast %16 : i32 to index
      %18 = vector.load %arg5[%c0_10, %17] : memref<1x128xf32, #tpu.memory_space<vmem>>, vector<1x128xf32>
      %c0_11 = arith.constant 0 : index
      %c0_12 = arith.constant 0 : index
      %19 = vector.load %arg7[%c0_11, %c0_12] : memref<16x128xf32, #tpu.memory_space<vmem>>, vector<16x128xf32>
      %20 = vector.broadcast %18 : vector<1x128xf32> to vector<16x128xf32>
      %21 = arith.addf %19, %20 : vector<16x128xf32>
      %c0_13 = arith.constant 0 : index
      %c0_14 = arith.constant 0 : index
      %22 = vector.load %arg6[%c0_13, %c0_14] : memref<16x128xf32, #tpu.memory_space<vmem>>, vector<16x128xf32>
      tpu.vector_store %arg6[%c0_13, %c0_14], %21 {strides = array<i32>} : memref<16x128xf32, #tpu.memory_space<vmem>>, vector<16x128xf32>,
    } else {
    }
    return
  }
  func.func @transform_0(%arg0: i32, %arg1: i32, %arg2: i32) -> (i32, i32) {
    %c0_i32 = arith.constant 0 : i32
    %c0_i32_0 = arith.constant 0 : i32
    return %arg0, %c0_i32 : i32, i32
  }
  func.func @transform_1(%arg0: i32, %arg1: i32, %arg2: i32) -> (i32, i32) {
    %c0_i32 = arith.constant 0 : i32
    return %arg2, %arg1 : i32, i32
  }
  func.func @transform_2(%arg0: i32, %arg1: i32, %arg2: i32) -> (i32, i32) {
    %c0_i32 = arith.constant 0 : i32
    %c0_i32_0 = arith.constant 0 : i32
    %c0_i32_1 = arith.constant 0 : i32
    return %c0_i32, %c0_i32_0 : i32, i32
  }
  func.func @transform_3(%arg0: i32, %arg1: i32, %arg2: i32) -> (i32, i32) {
    %c0_i32 = arith.constant 0 : i32
    return %arg0, %arg1 : i32, i32
  }
}

</mosaic_0001>

<llo_original>
// kernel: tpu_custom_call.1
$region0: #{tpu_custom_call.1}
  #allocation0 [shape = 'u32[]', space=smem, size = 0x4, offset = 0x4, fixed_abs, tag = 'smem constant byte address 0x4 - core index']
  #allocation1 [shape = 'u32[144,128]{1,0:T(1,128)}', space=vmem, size = 0x12000, scoped, tag = 'internal scratch']
  #allocation2 [shape = 'f32[16,128]{1,0:T(8,128)}', space=vmem, size = 0x2000, scoped, tag = 'scratch operand']
  %s0 = inlined_call_operand.hbm [shape: bf16[16,128], index: 0, kind: input, shape index: {}]
  %s1 = inlined_call_operand.hbm [shape: bf16[128,128], index: 1, kind: input, shape index: {}]
  %s2 = inlined_call_operand.vmem [shape: f32[1,128], index: 2, kind: input, shape index: {}]
  %s3 = inlined_call_operand.hbm [shape: f32[16,128], index: 3, kind: output, shape index: {}]
  %s4 = sld [smem:[#allocation0]]
  $region38: #{tpu_custom_call.1} parent=0
    _
  %s6 = ssub.s32 1, %s4
  %s7 = scalar_select 0, %s6, %s4
  $region1: #{tpu_custom_call.1} parent=0
    #allocation3 [shape = 'u8[4096]{0}', space=vmem, size = 0x1000, scoped, tag = 'input window, operand 0, single buffered']
    #allocation4 [shape = 's32[1]{0}', space=sflag, size = 0x4, scoped, tag = 'scoped memory for tpu_custom_call.1']
    #allocation5 [shape = 's32[1]{0}', space=sflag, size = 0x4, scoped, tag = 'scoped memory for tpu_custom_call.1']
    #allocation6 [shape = 'u8[32768]{0}', space=vmem, size = 0x8000, scoped, tag = 'input window, operand 1, single buffered']
    #allocation7 [shape = 's32[1]{0}', space=sflag, size = 0x4, scoped, tag = 'scoped memory for tpu_custom_call.1']
    #allocation8 [shape = 'u8[8192]{0}', space=vmem, size = 0x2000, scoped, tag = 'output window, operand 0, single buffered']
    %8 = vsyncpa [#allocation4], 0
    %9 = vsyncpa [#allocation7], 0
    %10 = vsyncpa [#allocation5], 0
    // Predicated region
    $region2: #{tpu_custom_call.1} parent=1 // pred_check
      _
    $region3: #{tpu_custom_call.1} parent=1 // pred_check_branch
      %12 = sbr.rel (0) target = $region5
    $region4: #{tpu_custom_call.1} parent=1 // pred_region
      %s14 = ssub.s32 128, 128
      %15 = vsyncadd [#allocation4], %s14
      %s16 = sshll.u32 [#allocation3], 4
      %s17 = int_to_ptr.vmem [resolvable:$true] %s16
      %22 = dma.hbm_to_vmem [thread:$0]  %s0, 128, %s17, [#allocation4], 64, 64, 4
    $region5: #{tpu_custom_call.1} parent=1 // pred_fallthru
      _
    // Predicated region
    $region6: #{tpu_custom_call.1} parent=1 // pred_check
      _
    $region7: #{tpu_custom_call.1} parent=1 // pred_check_branch
      %24 = sbr.rel (0) target = $region9
    $region8: #{tpu_custom_call.1} parent=1 // pred_region
      %s26 = ssub.s32 1024, 1024
      %27 = vsyncadd [#allocation7], %s26
      %s28 = sshll.u32 [#allocation6], 4
      %s29 = int_to_ptr.vmem [resolvable:$true] %s28
      %34 = dma.hbm_to_vmem [thread:$0]  %s1, 1024, %s29, [#allocation7], 64, 64, 4
    $region9: #{tpu_custom_call.1} parent=1 // pred_fallthru
      _
    // Predicated region
    $region10: #{tpu_custom_call.1} parent=1 // pred_check
      _
    $region11: #{tpu_custom_call.1} parent=1 // pred_check_branch
      %36 = sbr.rel (0) target = $region13
    $region12: #{tpu_custom_call.1} parent=1 // pred_region
      _
    $region13: #{tpu_custom_call.1} parent=1 // pred_fallthru
      _
    // Predicated region
    $region14: #{tpu_custom_call.1} parent=1 // pred_check
      _
    $region15: #{tpu_custom_call.1} parent=1 // pred_check_branch
      %38 = sbr.rel (0) target = $region17
    $region16: #{tpu_custom_call.1} parent=1 // pred_region
      %39 = dma.done [#allocation4], 128
    $region17: #{tpu_custom_call.1} parent=1 // pred_fallthru
      _
    // Predicated region
    $region18: #{tpu_custom_call.1} parent=1 // pred_check
      _
    $region19: #{tpu_custom_call.1} parent=1 // pred_check_branch
      %41 = sbr.rel (0) target = $region21
    $region20: #{tpu_custom_call.1} parent=1 // pred_region
      %42 = dma.done [#allocation7], 1024
    $region21: #{tpu_custom_call.1} parent=1 // pred_fallthru
      _
    %p44 = scmp.eq.s32.totalorder 0, 0
    // Predicated region
    $region22: #{tpu_custom_call.1} parent=1 // pred_check
      %p45 = pneg %p44
    $region23: #{tpu_custom_call.1} parent=1 // pred_check_branch
      %47 = sbr.rel (%p45) target = $region25
    $region24: #{tpu_custom_call.1} parent=1 // pred_region
      %48 = vst [vmem:[#allocation2] sm:$0xff] 0.0
      %49 = vst [vmem:[#allocation2 + $0x8] sm:$0xff] 0.0
    $region25: #{tpu_custom_call.1} parent=1 // pred_fallthru
      _
    %s50 = smul.u32 0, 128
    %s51 = sshra.s32 %s50, 7
    %s52 = sand.u32 %s50, 127
    %s53 = smul.addr %s51, 4
    %s54 = scalar_lea.vmem [#allocation3], %s53
    %v55 = vld [vmem:[%s54] sm:$0xf]
    %v56 = vld [vmem:[%s54 + $0x4] sm:$0xf]
    %v57 = vld [vmem:[#allocation2] sm:$0xff]
    %v58 = vld [vmem:[#allocation2 + $0x8] sm:$0xff]
    %v59 = vld [vmem:[#allocation6] sm:$0xf]
    %v60 = vld [vmem:[#allocation6 + $0x4] sm:$0xf]
    %v61 = vld [vmem:[#allocation6 + $0x8] sm:$0xf]
    %v62 = vld [vmem:[#allocation6 + $0xc] sm:$0xf]
    %v63 = vld [vmem:[#allocation6 + $0x10] sm:$0xf]
    %v64 = vld [vmem:[#allocation6 + $0x14] sm:$0xf]
    %v65 = vld [vmem:[#allocation6 + $0x18] sm:$0xf]
    %v66 = vld [vmem:[#allocation6 + $0x1c] sm:$0xf]
    %v67 = vld [vmem:[#allocation6 + $0x20] sm:$0xf]
    %v68 = vld [vmem:[#allocation6 + $0x24] sm:$0xf]
    %v69 = vld [vmem:[#allocation6 + $0x28] sm:$0xf]
    %v70 = vld [vmem:[#allocation6 + $0x2c] sm:$0xf]
    %v71 = vld [vmem:[#allocation6 + $0x30] sm:$0xf]
    %v72 = vld [vmem:[#allocation6 + $0x34] sm:$0xf]
    %v73 = vld [vmem:[#allocation6 + $0x38] sm:$0xf]
    %v74 = vld [vmem:[#allocation6 + $0x3c] sm:$0xf]
    %v77 = vunpack.c.l.b16 %v55
    %v78 = vunpack.c.l.b16 %v56
    %v79 = vpack.c.b16 %v78, %v77
    %v97 = vunpack.c.l.b16 %v59
    %v98 = vunpack.c.l.b16 %v60
    %v99 = vunpack.c.l.b16 %v61
    %v100 = vunpack.c.l.b16 %v62
    %v101 = vunpack.c.l.b16 %v63
    %v102 = vunpack.c.l.b16 %v64
    %v103 = vunpack.c.l.b16 %v65
    %v104 = vunpack.c.l.b16 %v66
    %v105 = vunpack.c.l.b16 %v67
    %v106 = vunpack.c.l.b16 %v68
    %v107 = vunpack.c.l.b16 %v69
    %v108 = vunpack.c.l.b16 %v70
    %v109 = vunpack.c.l.b16 %v71
    %v110 = vunpack.c.l.b16 %v72
    %v111 = vunpack.c.l.b16 %v73
    %v112 = vunpack.c.l.b16 %v74
    %v113 = vpack.c.b16 %v98, %v97
    %v114 = vpack.c.b16 %v100, %v99
    %v115 = vpack.c.b16 %v102, %v101
    %v116 = vpack.c.b16 %v104, %v103
    %v117 = vpack.c.b16 %v106, %v105
    %v118 = vpack.c.b16 %v108, %v107
    %v119 = vpack.c.b16 %v110, %v109
    %v120 = vpack.c.b16 %v112, %v111
    %129 = vmatprep.subr.bf16.mxu0 0
    %130 = vmatpush1.bf16.msra.mxu0 %v120
    %131 = vmatprep.subr.bf16.mxu0 0
    %132 = vmatpush1.bf16.msra.mxu0 %v119
    %133 = vmatprep.subr.bf16.mxu0 0
    %134 = vmatpush1.bf16.msra.mxu0 %v118
    %135 = vmatprep.subr.bf16.mxu0 0
    %136 = vmatpush1.bf16.msra.mxu0 %v117
    %137 = vmatprep.subr.bf16.mxu0 0
    %138 = vmatpush1.bf16.msra.mxu0 %v116
    %139 = vmatprep.subr.bf16.mxu0 0
    %140 = vmatpush1.bf16.msra.mxu0 %v115
    %141 = vmatprep.subr.bf16.mxu0 0
    %142 = vmatpush1.bf16.msra.mxu0 %v114
    %143 = vmatprep.subr.bf16.mxu0 0
    %144 = vmatpush1.bf16.msra.mxu0 %v113
    %145 = vmatprep.subr.bf16.mxu0 0
    %146 = vmatpush2.bf16.msra.mxu0 0
    %147 = vmatprep.subr.bf16.mxu0 0
    %148 = vmatpush2.bf16.msra.mxu0 0
    %149 = vmatprep.subr.bf16.mxu0 0
    %150 = vmatpush2.bf16.msra.mxu0 0
    %151 = vmatprep.subr.bf16.mxu0 0
    %152 = vmatpush2.bf16.msra.mxu0 0
    %153 = vmatprep.subr.bf16.mxu0 0
    %154 = vmatpush2.bf16.msra.mxu0 0
    %155 = vmatprep.subr.bf16.mxu0 0
    %156 = vmatpush2.bf16.msra.mxu0 0
    %157 = vmatprep.subr.bf16.mxu0 0
    %158 = vmatpush2.bf16.msra.mxu0 0
    %159 = vmatprep.subr.bf16.mxu0 0
    %160 = vmatpush2.bf16.msra.mxu0 0
    %161 = vmatprep.mubr.bf16.mxu0 0
    %162 = vmatmul.mubr.bf16.gmra.mxu0 %v79
    %v163 = vpop.f32.mrf.mxu0
    %v164 = vadd.f32 0.0, %v163
    %v165 = vpop.f32.mrf.mxu0
    %v166 = vpop.f32.mrf.mxu0
    %v167 = vadd.f32 0.0, %v166
    %v168 = vpop.f32.mrf.mxu0
    %169 = vdwg.mxu0
    %v170 = vadd.f32 %v57, %v164
    %v171 = vadd.f32 %v58, %v167
    %172 = vst [vmem:[#allocation2] sm:$0xff] %v170
    %173 = vst [vmem:[#allocation2 + $0x8] sm:$0xff] %v171
    // Predicated region
    $region26: #{tpu_custom_call.1} parent=1 // pred_check
      %p174 = pneg %p44
    $region27: #{tpu_custom_call.1} parent=1 // pred_check_branch
      %176 = sbr.rel (%p174) target = $region29
    $region28: #{tpu_custom_call.1} parent=1 // pred_region
      %s177 = smul.u32 0, 128
      %s178 = sshra.s32 %s177, 7
      %s179 = sand.u32 %s177, 127
      %s180 = scalar_lea.vmem %s2, %s178
      %v181 = vld [vmem:[%s180] sm:$0x1]
      %v182 = vld [vmem:[#allocation2] sm:$0xff]
      %v183 = vld [vmem:[#allocation2 + $0x8] sm:$0xff]
      %v185 = vlaneseq
      %v186 = vshrl.u32 %v185, 7
      %v187 = vsub.s32 0, %v186
      %v188 = vrot.slane %v181, %v187
      %v190 = vadd.f32 %v182, %v188
      %v191 = vadd.f32 %v183, %v188
      %192 = vst [vmem:[#allocation8] sm:$0xff] %v190
      %193 = vst [vmem:[#allocation8 + $0x8] sm:$0xff] %v191
    $region29: #{tpu_custom_call.1} parent=1 // pred_fallthru
      _
    // Predicated region
    $region30: #{tpu_custom_call.1} parent=1 // pred_check
      _
    $region31: #{tpu_custom_call.1} parent=1 // pred_check_branch
      %195 = sbr.rel (0) target = $region33
    $region32: #{tpu_custom_call.1} parent=1 // pred_region
      %s197 = ssub.s32 256, 256
      %198 = vsyncadd [#allocation5], %s197
      %s199 = sshll.u32 [#allocation8], 4
      %s200 = int_to_ptr.vmem [resolvable:$true] %s199
      %205 = dma.vmem_to_hbm [thread:$0]  %s200, 256, %s3, [#allocation5], 128, 128, 8
    $region33: #{tpu_custom_call.1} parent=1 // pred_fallthru
      _
    // Predicated region
    $region34: #{tpu_custom_call.1} parent=1 // pred_check
      _
    $region35: #{tpu_custom_call.1} parent=1 // pred_check_branch
      %207 = sbr.rel (0) target = $region37
    $region36: #{tpu_custom_call.1} parent=1 // pred_region
      %208 = dma.done [#allocation5], 256
    $region37: #{tpu_custom_call.1} parent=1 // pred_fallthru
      _
    %209 = vsyncpa [#allocation4], 1
    %210 = vsyncpa [#allocation7], 1
    %211 = vsyncpa [#allocation5], 1

</llo_original>
